<compile_context>
chip_gen: v5e
topology: v5e:2x2
jax: 0.10.0
libtpu: 0.0.40
codegen_flags: <defaults>
</compile_context>

<pallas_src>
import jax
import jax.numpy as jnp
from jax import lax
from jax.experimental import pallas as pl
from jax.experimental.pallas import tpu as pltpu


_SUBLANE = 8
_H_CHUNK = 512             # hidden-dim chunk width used when H is large
_H_CHUNK_THRESHOLD = 2048  # chunk the hidden dim above this many columns


def _round_up(x, m):
    return (x + m - 1) // m * m


def _cdiv(a, b):
    return -(-a // b)


def _vmem_capacity_bytes():
    """Physical VMEM per TensorCore, with a conservative fallback (v7x: 64 MiB)."""
    try:
        info = pltpu.get_tpu_info()
        for name in ("vmem_capacity_bytes", "vmem_size_bytes", "vmem_bytes"):
            v = getattr(info, name, None)
            if v:
                return int(v)
    except Exception:
        pass
    return 64 * 1024 * 1024


def _vmem_limit(footprint_bytes, cap):
    """Scoped-VMEM request: real footprint x2 + margin, clamped to the chip."""
    want = 2 * int(footprint_bytes) + (8 << 20)
    return int(min(max(want, 16 << 20), int(cap * 0.9)))


def _make_fused_kernel(kt, block_h):
    """fc1 -> bias -> ReLU -> fc2 (+bias) with whole-VMEM weight refs.

    Used by both the gridless small-batch path and the batch-tiled path
    (x_ref/out_ref are batch tiles; weights are whole-array VMEM residents).
    When kt > 1 the hidden dim is processed in block_h-wide chunks so the live
    (block_m, H) intermediate stays bounded instead of spilling.
    """

    def kernel(x_ref, w1_ref, b1_ref, w2_ref, b2_ref, out_ref):
        xb = x_ref[...].astype(w1_ref.dtype)      # f32 -> bf16: free VPU pack
        bm = xb.shape[0]
        out_cols = w2_ref.shape[1]

        if kt == 1:
            h = jnp.dot(xb, w1_ref[...], preferred_element_type=jnp.float32)
            h = jnp.maximum(h + b1_ref[...], 0.0)
            acc = jnp.dot(h.astype(w2_ref.dtype), w2_ref[...],
                          preferred_element_type=jnp.float32)
        else:
            def body(c, acc):
                hs = pl.multiple_of(c * block_h, block_h)
                h = jnp.dot(xb, w1_ref[:, pl.ds(hs, block_h)],
                            preferred_element_type=jnp.float32)
                h = jnp.maximum(h + b1_ref[:, pl.ds(hs, block_h)], 0.0)
                return acc + jnp.dot(h.astype(w2_ref.dtype),
                                     w2_ref[pl.ds(hs, block_h), :],
                                     preferred_element_type=jnp.float32)

            acc = lax.fori_loop(0, kt, body,
                                jnp.zeros((bm, out_cols), jnp.float32))

        out_ref[...] = (acc + b2_ref[...]).astype(out_ref.dtype)

    return kernel


def _streamed_kernel(x_ref, w1_ref, b1_ref, w2_ref, b2_ref, out_ref, acc_ref):
    """Fallback when the weights don't fit VMEM residency: grid axis 1 streams
    hidden-dim chunks of w1/w2; fc2 partials accumulate in f32 VMEM scratch."""
    k = pl.program_id(1)

    @pl.when(k == 0)
    def _():
        acc_ref[...] = jnp.zeros_like(acc_ref)

    h = jnp.dot(x_ref[...].astype(w1_ref.dtype), w1_ref[...],
                preferred_element_type=jnp.float32)
    h = jnp.maximum(h + b1_ref[...], 0.0)
    acc_ref[...] += jnp.dot(h.astype(w2_ref.dtype), w2_ref[...],
                            preferred_element_type=jnp.float32)

    @pl.when(k == pl.num_programs(1) - 1)
    def _():
        out_ref[...] = (acc_ref[...] + b2_ref[...]).astype(out_ref.dtype)


def prepare_fcnet_params(w1_t, b1, w2_t, b2):
    """One-time parameter prep (hoisted out of the per-call hot path).

    w1_t: (In, H), b1: (H,) or (1, H), w2_t: (H, Out), b2: (Out,) or (1, Out).
    Weights are stored pre-transposed (in_features, out_features), i.e. the
    same math as PyTorch's x @ W.T + b with W of shape (out, in).

    Weights are cast to bf16 (MXU-native) once; biases to f32.  The only
    padding ever applied is rounding a very large hidden dim up to a multiple
    of the in-kernel chunk size (zero columns -> ReLU(0) = 0 -> exact).
    """
    In, H = w1_t.shape
    Hw2, Out = w2_t.shape
    assert Hw2 == H, "fc1/fc2 hidden dims disagree"

    bf16, f32 = jnp.bfloat16, jnp.float32
    w1p = w1_t.astype(bf16)
    w2p = w2_t.astype(bf16)
    b1p = jnp.asarray(b1, f32).reshape(1, H)
    b2p = jnp.asarray(b2, f32).reshape(1, Out)

    Hp = _round_up(H, _H_CHUNK) if H > _H_CHUNK_THRESHOLD else H
    if Hp != H:
        w1p = jnp.zeros((In, Hp), bf16).at[:, :H].set(w1p)
        b1p = jnp.zeros((1, Hp), f32).at[:, :H].set(b1p)
        w2p = jnp.zeros((Hp, Out), bf16).at[:H, :].set(w2p)

    return dict(w1=w1p, b1=b1p, w2=w2p, b2=b2p, dims=(In, H, Out), Hp=Hp)


def fcnet_forward(x, params, *, block_m=None, out_dtype=None):
    """Fused FCNet forward: relu(x @ w1 + b1) @ w2 + b2."""
    B, In = x.shape
    In_p, H, Out = params["dims"]
    assert In == In_p, "input feature dim mismatch"
    Hp = params["Hp"]
    w1p, b1p, w2p, b2p = params["w1"], params["b1"], params["w2"], params["b2"]

    out_dtype = x.dtype if out_dtype is None else out_dtype
    osz = jnp.dtype(out_dtype).itemsize

    cap = _vmem_capacity_bytes()
    if block_m is None:
        # 512 on 128-MiB-VMEM parts (v5e/v6e), 256 on v7x (64 MiB per TC).
        block_m = 512 if cap >= (96 << 20) else 256

    block_h = Hp if Hp <= _H_CHUNK_THRESHOLD else _H_CHUNK
    kt = Hp // block_h

    weight_bytes = (In * Hp + Hp * Out) * 2 + (Hp + Out) * 4
    h_ws = lambda bm: bm * block_h * 6 + bm * Out * 4   # h (f32 + bf16) + acc

    # ---- Path 1: whole problem in VMEM -- no grid, no pipeline, no padding,
    #      no post-slice.  Footprint gate keeps huge-H/In cases off this path.
    single_bytes = weight_bytes + B * In * 4 + B * Out * osz + h_ws(max(B, 8))
    if B <= block_m and single_bytes <= int(cap * 0.4):
        cost = pl.CostEstimate(
            flops=2 * B * Hp * (In + Out), transcendentals=0,
            bytes_accessed=B * In * 4 + weight_bytes + B * Out * osz)
        vmem = pl.BlockSpec(memory_space=pltpu.MemorySpace.VMEM)
        return pl.pallas_call(
            _make_fused_kernel(kt, block_h),
            out_shape=jax.ShapeDtypeStruct((B, Out), out_dtype),
            in_specs=[vmem] * 5,
            out_specs=vmem,
            compiler_params=pltpu.CompilerParams(
                vmem_limit_bytes=_vmem_limit(single_bytes, cap)),
            cost_estimate=cost,
        )(x, w1p, b1p, w2p, b2p)

    # ---- Batch tiling (large B).  Keep the tile count even so v7x's two
    #      TensorCores stay balanced; shrink block_m rather than padding rows,
    #      and re-fit block_m so padded garbage rows are minimal.
    block_m = min(block_m, _round_up(B, _SUBLANE))
    n_bt = _cdiv(B, block_m)
    if n_bt > 1 and n_bt % 2 == 1:
        n_bt += 1
    block_m = _round_up(_cdiv(B, n_bt), _SUBLANE)
    Bp = n_bt * block_m

    xp = x if Bp == B else jnp.zeros((Bp, In), x.dtype).at[:B].set(x)

    cost = pl.CostEstimate(
        flops=2 * Bp * Hp * (In + Out), transcendentals=0,
        bytes_accessed=Bp * In * 4 + weight_bytes + Bp * Out * osz)

    resident_bytes = (weight_bytes + 2 * block_m * In * 4
                      + 2 * block_m * Out * osz + h_ws(block_m))

    if resident_bytes <= int(cap * 0.7):
        # ---- Path 2: weights/biases as whole-array VMEM operands (single
        #      copy, no double-buffering); only x/out batch tiles are streamed
        #      and pipelined.  Hidden dim chunked in-kernel when large.
        vmem = pl.BlockSpec(memory_space=pltpu.MemorySpace.VMEM)
        out_p = pl.pallas_call(
            _make_fused_kernel(kt, block_h),
            out_shape=jax.ShapeDtypeStruct((Bp, Out), out_dtype),
            grid=(n_bt,),
            in_specs=[
                pl.BlockSpec((block_m, In), lambda i: (i, 0)),
                vmem, vmem, vmem, vmem,
            ],
            out_specs=pl.BlockSpec((block_m, Out), lambda i: (i, 0)),
            compiler_params=pltpu.CompilerParams(
                dimension_semantics=("parallel",),
                vmem_limit_bytes=_vmem_limit(resident_bytes, cap)),
            cost_estimate=cost,
        )(xp, w1p, b1p, w2p, b2p)
    else:
        # ---- Path 3 (v7x corner: weights too big to keep resident): stream
        #      hidden-dim chunks of w1/w2 on a second, "arbitrary" grid axis
        #      and accumulate fc2 partials in an f32 VMEM scratch accumulator.
        #      (A single (block_m, In) / (block_h, Out) tile is assumed to fit
        #      VMEM -- always true at FCNet/MLP scale.)
        streamed_bytes = (2 * block_m * In * 4
                          + 2 * (In * block_h + block_h * Out) * 2
                          + 2 * (block_h + Out) * 4
                          + 2 * block_m * Out * osz + h_ws(block_m))
        out_p = pl.pallas_call(
            _streamed_kernel,
            out_shape=jax.ShapeDtypeStruct((Bp, Out), out_dtype),
            grid=(n_bt, kt),
            in_specs=[
                pl.BlockSpec((block_m, In), lambda i, k: (i, 0)),
                pl.BlockSpec((In, block_h), lambda i, k: (0, k)),
                pl.BlockSpec((1, block_h), lambda i, k: (0, k)),
                pl.BlockSpec((block_h, Out), lambda i, k: (k, 0)),
                pl.BlockSpec((1, Out), lambda i, k: (0, 0)),
            ],
            out_specs=pl.BlockSpec((block_m, Out), lambda i, k: (i, 0)),
            scratch_shapes=[pltpu.VMEM((block_m, Out), jnp.float32)],
            compiler_params=pltpu.CompilerParams(
                dimension_semantics=("parallel", "arbitrary"),
                vmem_limit_bytes=_vmem_limit(streamed_bytes, cap)),
            cost_estimate=cost,
        )(xp, w1p, b1p, w2p, b2p)

    # Only sliced when B was not tile-aligned (Out is never padded).
    return out_p if Bp == B else out_p[:B]


def init_linear_params(key, in_features, out_features):
    """Mimic torch.nn.Linear default init: U(-1/sqrt(fan_in), +1/sqrt(fan_in))."""
    kw, kb = jax.random.split(key)
    bound = 1.0 / (in_features ** 0.5)
    # PyTorch weight shape is (out, in); we store transposed (in, out).
    w_t = jax.random.uniform(kw, (in_features, out_features), jnp.float32,
                             -bound, bound)
    b = jax.random.uniform(kb, (1, out_features), jnp.float32, -bound, bound)
    return w_t, b


if __name__ == "__main__":
    # Small, MLP-consistent shapes (exercises the gridless VMEM-resident path).
    batch, input_size, hidden_size, output_size = 8, 64, 32, 16

    key = jax.random.PRNGKey(0)
    kx, k1, k2 = jax.random.split(key, 3)
    x = jax.random.normal(kx, (batch, input_size), jnp.float32)
    w1_t, b1 = init_linear_params(k1, input_size, hidden_size)
    w2_t, b2 = init_linear_params(k2, hidden_size, output_size)

    params = prepare_fcnet_params(w1_t, b1, w2_t, b2)   # one-time, off hot path
    out = jax.block_until_ready(fcnet_forward(x, params))

    # Reference with the kernel's precision contract: bf16 matmul operands,
    # f32 accumulation / bias / ReLU (same semantics as the PyTorch forward).
    def bf16_round(a):
        return a.astype(jnp.bfloat16).astype(jnp.float32)

    h_ref = jnp.maximum(bf16_round(x) @ bf16_round(w1_t) + b1, 0.0)
    ref = bf16_round(h_ref) @ bf16_round(w2_t) + b2

    assert out.shape == (batch, output_size) and out.dtype == x.dtype
    assert jnp.allclose(out, ref, atol=1e-2, rtol=1e-2), float(
        jnp.max(jnp.abs(out - ref)))

    print("KERNEL_OK")
</pallas_src>

<mosaic_0001>
module attributes {stable_mosaic.version = 11 : i64} {
  func.func @kernel(%arg0: memref<8x64xf32, #tpu.memory_space<vmem>>, %arg1: memref<64x32xbf16, #tpu.memory_space<vmem>>, %arg2: memref<1x32xf32, #tpu.memory_space<vmem>>, %arg3: memref<32x16xbf16, #tpu.memory_space<vmem>>, %arg4: memref<1x16xf32, #tpu.memory_space<vmem>>, %arg5: memref<8x16xf32, #tpu.memory_space<vmem>>) attributes {dimension_semantics = [], scalar_prefetch = 0 : i64, scratch_operands = 0 : i64, tpu.core_type = #tpu.core_type<tc>} {
    %c0 = arith.constant 0 : index
    %c0_0 = arith.constant 0 : index
    %0 = vector.load %arg0[%c0, %c0_0] : memref<8x64xf32, #tpu.memory_space<vmem>>, vector<8x64xf32>
    %1 = arith.truncf %0 : vector<8x64xf32> to vector<8x64xbf16>
    %c0_1 = arith.constant 0 : index
    %c0_2 = arith.constant 0 : index
    %2 = vector.load %arg1[%c0_1, %c0_2] : memref<64x32xbf16, #tpu.memory_space<vmem>>, vector<64x32xbf16>
    %cst = arith.constant dense<0.000000e+00> : vector<8x32xf32>
    %3 = tpu.matmul %1, %2, %cst {dimension_numbers = #tpu.dot_dimension_numbers<[1], [0], [0], [1], [0, 0, 1, 1], [], []>} : vector<8x64xbf16>, vector<64x32xbf16>, vector<8x32xf32> -> vector<8x32xf32>
    %c0_3 = arith.constant 0 : index
    %c0_4 = arith.constant 0 : index
    %4 = vector.load %arg2[%c0_3, %c0_4] : memref<1x32xf32, #tpu.memory_space<vmem>>, vector<1x32xf32>
    %5 = vector.broadcast %4 : vector<1x32xf32> to vector<8x32xf32>
    %6 = arith.addf %3, %5 : vector<8x32xf32>
    %cst_5 = arith.constant 0.000000e+00 : f32
    %7 = vector.broadcast %cst_5 : f32 to vector<8x32xf32>
    %8 = arith.maximumf %6, %7 : vector<8x32xf32>
    %9 = arith.truncf %8 : vector<8x32xf32> to vector<8x32xbf16>
    %c0_6 = arith.constant 0 : index
    %c0_7 = arith.constant 0 : index
    %10 = vector.load %arg3[%c0_6, %c0_7] : memref<32x16xbf16, #tpu.memory_space<vmem>>, vector<32x16xbf16>
    %cst_8 = arith.constant dense<0.000000e+00> : vector<8x16xf32>
    %11 = tpu.matmul %9, %10, %cst_8 {dimension_numbers = #tpu.dot_dimension_numbers<[1], [0], [0], [1], [0, 0, 1, 1], [], []>} : vector<8x32xbf16>, vector<32x16xbf16>, vector<8x16xf32> -> vector<8x16xf32>
    %c0_9 = arith.constant 0 : index
    %c0_10 = arith.constant 0 : index
    %12 = vector.load %arg4[%c0_9, %c0_10] : memref<1x16xf32, #tpu.memory_space<vmem>>, vector<1x16xf32>
    %13 = vector.broadcast %12 : vector<1x16xf32> to vector<8x16xf32>
    %14 = arith.addf %11, %13 : vector<8x16xf32>
    %c0_11 = arith.constant 0 : index
    %c0_12 = arith.constant 0 : index
    %15 = vector.load %arg5[%c0_11, %c0_12] : memref<8x16xf32, #tpu.memory_space<vmem>>, vector<8x16xf32>
    tpu.vector_store %arg5[%c0_11, %c0_12], %14 {strides = array<i32>} : memref<8x16xf32, #tpu.memory_space<vmem>>, vector<8x16xf32>,
    return
  }
}

</mosaic_0001>

<llo_original>
// kernel: tpu_custom_call.1
$region0: #{tpu_custom_call.1}
  #allocation0 [shape = 'u32[]', space=smem, size = 0x4, offset = 0x4, fixed_abs, tag = 'smem constant byte address 0x4 - core index']
  #allocation1 [shape = 'u32[72,128]{1,0:T(1,128)}', space=vmem, size = 0x9000, scoped, tag = 'internal scratch']
  %s0 = inlined_call_operand.vmem [shape: f32[8,64], index: 0, kind: input, shape index: {}]
  %s1 = inlined_call_operand.vmem [shape: bf16[64,32], index: 1, kind: input, shape index: {}]
  %s2 = inlined_call_operand.vmem [shape: f32[1,32], index: 2, kind: input, shape index: {}]
  %s3 = inlined_call_operand.vmem [shape: bf16[32,16], index: 3, kind: input, shape index: {}]
  %s4 = inlined_call_operand.vmem [shape: f32[1,16], index: 4, kind: input, shape index: {}]
  %s5 = inlined_call_operand.hbm [shape: f32[8,16], index: 5, kind: output, shape index: {}]
  %s6 = sld [smem:[#allocation0]]
  $region30: #{tpu_custom_call.1} parent=0
    _
  %s8 = ssub.s32 1, %s6
  %s9 = scalar_select 0, %s8, %s6
  $region1: #{tpu_custom_call.1} parent=0
    #allocation2 [shape = 'u8[4096]{0}', space=vmem, size = 0x1000, scoped, tag = 'output window, operand 0, single buffered']
    #allocation3 [shape = 's32[1]{0}', space=sflag, size = 0x4, scoped, tag = 'scoped memory for tpu_custom_call.1']
    %10 = vsyncpa [#allocation3], 0
    // Predicated region
    $region2: #{tpu_custom_call.1} parent=1 // pred_check
      _
    $region3: #{tpu_custom_call.1} parent=1 // pred_check_branch
      %12 = sbr.rel (0) target = $region5
    $region4: #{tpu_custom_call.1} parent=1 // pred_region
      _
    $region5: #{tpu_custom_call.1} parent=1 // pred_fallthru
      _
    // Predicated region
    $region6: #{tpu_custom_call.1} parent=1 // pred_check
      _
    $region7: #{tpu_custom_call.1} parent=1 // pred_check_branch
      %14 = sbr.rel (0) target = $region9
    $region8: #{tpu_custom_call.1} parent=1 // pred_region
      _
    $region9: #{tpu_custom_call.1} parent=1 // pred_fallthru
      _
    // Predicated region
    $region10: #{tpu_custom_call.1} parent=1 // pred_check
      _
    $region11: #{tpu_custom_call.1} parent=1 // pred_check_branch
      %16 = sbr.rel (0) target = $region13
    $region12: #{tpu_custom_call.1} parent=1 // pred_region
      _
    $region13: #{tpu_custom_call.1} parent=1 // pred_fallthru
      _
    // Predicated region
    $region14: #{tpu_custom_call.1} parent=1 // pred_check
      _
    $region15: #{tpu_custom_call.1} parent=1 // pred_check_branch
      %18 = sbr.rel (0) target = $region17
    $region16: #{tpu_custom_call.1} parent=1 // pred_region
      _
    $region17: #{tpu_custom_call.1} parent=1 // pred_fallthru
      _
    // Predicated region
    $region18: #{tpu_custom_call.1} parent=1 // pred_check
      _
    $region19: #{tpu_custom_call.1} parent=1 // pred_check_branch
      %20 = sbr.rel (0) target = $region21
    $region20: #{tpu_custom_call.1} parent=1 // pred_region
      _
    $region21: #{tpu_custom_call.1} parent=1 // pred_fallthru
      _
    %v22 = vld [vmem:[%s0] sm:$0xff]
    %v23 = vpack.c.bf16 %v22, %v22
    %v24 = vld [vmem:[%s1] sm:$0xf]
    %v25 = vld [vmem:[%s1 + $0x4] sm:$0xf]
    %v26 = vld [vmem:[%s1 + $0x8] sm:$0xf]
    %v27 = vld [vmem:[%s1 + $0xc] sm:$0xf]
    %v28 = vld [vmem:[%s1 + $0x10] sm:$0xf]
    %v29 = vld [vmem:[%s1 + $0x14] sm:$0xf]
    %v30 = vld [vmem:[%s1 + $0x18] sm:$0xf]
    %v31 = vld [vmem:[%s1 + $0x1c] sm:$0xf]
    %v32 = vld [vmem:[%s2] sm:$0x1]
    %v34 = vperm.slane %v32, 0
    %v44 = vunpack.c.l.b16 %v24
    %v45 = vunpack.c.l.b16 %v25
    %v46 = vunpack.c.l.b16 %v26
    %v47 = vunpack.c.l.b16 %v27
    %v48 = vunpack.c.l.b16 %v28
    %v49 = vunpack.c.l.b16 %v29
    %v50 = vunpack.c.l.b16 %v30
    %v51 = vunpack.c.l.b16 %v31
    %v52 = vpack.c.b16 %v45, %v44
    %v53 = vpack.c.b16 %v47, %v46
    %v54 = vpack.c.b16 %v49, %v48
    %v55 = vpack.c.b16 %v51, %v50
    %vm60 = vcmask 523264
    %v62 = vsel %vm60, %v23, 0
    %64 = vmatpush.bf16.msra.mxu0 0
    %65 = vmatpush.bf16.msra.mxu0 0
    %66 = vmatpush.bf16.msra.mxu0 0
    %67 = vmatpush.bf16.msra.mxu0 0
    %68 = vmatpush.bf16.msra.mxu0 %v55
    %69 = vmatpush.bf16.msra.mxu0 %v54
    %70 = vmatpush.bf16.msra.mxu0 %v53
    %71 = vmatpush.bf16.msra.mxu0 %v52
    %72 = vmatmul.bf16.gmra.mxu0 %v62
    %v73 = vpop.f32.mrf.mxu0
    %v74 = vadd.f32 %v34, %v73
    %v75 = vpop.f32.mrf.mxu0
    %76 = vdwg.mxu0
    %v77 = vmax.f32 %v74, 0.0
    %v78 = vpack.c.bf16 %v77, %v77
    %v79 = vld [vmem:[%s3] sm:$0xf]
    %v80 = vld [vmem:[%s3 + $0x4] sm:$0xf]
    %v81 = vld [vmem:[%s3 + $0x8] sm:$0xf]
    %v82 = vld [vmem:[%s3 + $0xc] sm:$0xf]
    %v83 = vld [vmem:[%s4] sm:$0x1]
    %v85 = vperm.slane %v83, 0
    %v91 = vunpack.c.l.b16 %v79
    %v92 = vunpack.c.l.b16 %v80
    %v93 = vunpack.c.l.b16 %v81
    %v94 = vunpack.c.l.b16 %v82
    %v95 = vpack.c.b16 %v92, %v91
    %v96 = vpack.c.b16 %v94, %v93
    %vm99 = vcmask 261120
    %v101 = vsel %vm99, %v78, 0
    %103 = vmatpush.bf16.msra.mxu0 0
    %104 = vmatpush.bf16.msra.mxu0 0
    %105 = vmatpush.bf16.msra.mxu0 0
    %106 = vmatpush.bf16.msra.mxu0 0
    %107 = vmatpush.bf16.msra.mxu0 0
    %108 = vmatpush.bf16.msra.mxu0 0
    %109 = vmatpush.bf16.msra.mxu0 %v96
    %110 = vmatpush.bf16.msra.mxu0 %v95
    %111 = vmatmul.bf16.gmra.mxu0 %v101
    %v112 = vpop.f32.mrf.mxu0
    %v113 = vadd.f32 %v85, %v112
    %v114 = vpop.f32.mrf.mxu0
    %115 = vdwg.mxu0
    %vm116 = vcmask 130048
    %117 = vst.msk [vmem:[#allocation2] sm:$0xff] %vm116, %v113
    // Predicated region
    $region22: #{tpu_custom_call.1} parent=1 // pred_check
      _
    $region23: #{tpu_custom_call.1} parent=1 // pred_check_branch
      %119 = sbr.rel (0) target = $region25
    $region24: #{tpu_custom_call.1} parent=1 // pred_region
      %121 = vsyncadd [#allocation3], 0
      %s123 = sshll.u32 [#allocation2], 4
      %s124 = int_to_ptr.vmem [resolvable:$true] %s123
      %s125 = sshll.u32 %s5, 4
      %s126 = int_to_ptr.hbm [resolvable:$true] %s125
      %128 = dma.vmem_to_hbm [thread:$0]  %s124, 128, %s126, [#allocation3]
    $region25: #{tpu_custom_call.1} parent=1 // pred_fallthru
      _
    // Predicated region
    $region26: #{tpu_custom_call.1} parent=1 // pred_check
      _
    $region27: #{tpu_custom_call.1} parent=1 // pred_check_branch
      %130 = sbr.rel (0) target = $region29
    $region28: #{tpu_custom_call.1} parent=1 // pred_region
      %132 = dma.done [#allocation3], 128
    $region29: #{tpu_custom_call.1} parent=1 // pred_fallthru
      _
    %133 = vsyncpa [#allocation3], 1

</llo_original>
